<compile_context>
chip_gen: v6e
topology: v6e:2x2x1
jax: 0.10.0
libtpu: 0.0.40
codegen_flags: <defaults>
</compile_context>

<pallas_src>
import math
import functools

import jax
import jax.numpy as jnp
from jax import lax
from jax.experimental import pallas as pl
from jax.experimental.pallas import tpu as pltpu

_VMEM_LIMIT = 32 * 1024 * 1024


def _pick_tile(dim, candidates):
    """Largest candidate that divides `dim`, else the full dim (single block)."""
    for c in candidates:
        if dim % c == 0:
            return min(c, dim)
    return dim


# --------------------------------------------------------------------------- #
# Stage 1: batch-flattened fused QKV projection (+ head split, head-major out) #
# --------------------------------------------------------------------------- #
def _qkv_proj_kernel(x_ref, w_ref, b_ref, q_ref, k_ref, v_ref,
                     *, n_heads, d_k, d_v):
    """One grid step = one row-tile of the flattened (B*n) dim.

    x_ref : (tm, d_model) f32
    w_ref : (d_model, H*(2*d_k+d_v)) bf16   [Wq_all | Wk_all | Wv_all], head-major
    b_ref : (1, H*(2*d_k+d_v)) f32          (1/sqrt(d_k) already folded into Q part)
    q_ref, k_ref : (H, tm, d_k) bf16        head-major outputs
    v_ref        : (H, tm, d_v) bf16
    """
    x = x_ref[...].astype(jnp.bfloat16)
    qkv = jnp.dot(x, w_ref[...], preferred_element_type=jnp.float32) + b_ref[...]
    hk = n_heads * d_k
    for h in range(n_heads):
        q_ref[h] = qkv[:, h * d_k:(h + 1) * d_k].astype(q_ref.dtype)
        k_ref[h] = qkv[:, hk + h * d_k:hk + (h + 1) * d_k].astype(k_ref.dtype)
        v_ref[h] = qkv[:, 2 * hk + h * d_v:2 * hk + (h + 1) * d_v].astype(v_ref.dtype)


# --------------------------------------------------------------------------- #
# Stage 2: flash-style attention core (online softmax, per (batch, head))      #
# --------------------------------------------------------------------------- #
def _flash_attn_kernel(q_ref, k_ref, v_ref, o_ref, m_sc, l_sc, acc_sc):
    """Grid (B, H, n//tq, n//tkv); the last (kv) axis is the reduction axis.

    q_ref : (1, tq, d_k) bf16     k_ref : (1, tkv, d_k) bf16
    v_ref : (1, tkv, d_v) bf16    o_ref : (1, tq, d_v) bf16
    m_sc, l_sc : (tq, 1) f32      acc_sc : (tq, d_v) f32
    """
    ki = pl.program_id(3)

    @pl.when(ki == 0)
    def _():
        m_sc[...] = jnp.full_like(m_sc, -jnp.inf)
        l_sc[...] = jnp.zeros_like(l_sc)
        acc_sc[...] = jnp.zeros_like(acc_sc)

    q = q_ref[0]
    k = k_ref[0]
    v = v_ref[0]

    # Scores in f32 (scale already folded into Wq); contract d_k of both
    # operands directly -- no explicit transpose.
    s = lax.dot_general(q, k, (((1,), (1,)), ((), ())),
                        preferred_element_type=jnp.float32)        # (tq, tkv)

    m_prev = m_sc[...]
    m_new = jnp.maximum(m_prev, jnp.max(s, axis=-1, keepdims=True))
    alpha = jnp.exp(m_prev - m_new)
    # f32 exp (safe on v5e). TODO(synk): bf16 exp on v6e/v7x halves EUP work.
    p = jnp.exp(s - m_new)
    l_sc[...] = alpha * l_sc[...] + jnp.sum(p, axis=-1, keepdims=True)
    acc_sc[...] = alpha * acc_sc[...] + jnp.dot(
        p.astype(jnp.bfloat16), v, preferred_element_type=jnp.float32)
    m_sc[...] = m_new

    @pl.when(ki == pl.num_programs(3) - 1)
    def _():
        # Normalize once, AFTER the PV matmuls, on the small (tq, d_v) tile.
        o_ref[0] = (acc_sc[...] *
                    pl.reciprocal(l_sc[...], approx=True)).astype(o_ref.dtype)


# --------------------------------------------------------------------------- #
# Stage 3: batch-flattened output projection (sum over heads, no lane concat)  #
# --------------------------------------------------------------------------- #
def _out_proj_kernel(ctx_ref, wo_ref, bo_ref, o_ref, *, n_heads):
    """ctx_ref : (H, tm, d_v) bf16 ; wo_ref : (H, d_v, d_model) bf16
    bo_ref : (1, d_model) f32 ; o_ref : (tm, d_model) f32

    concat_h(ctx_h) @ Wo  ==  sum_h ctx_h @ Wo_h  (per-head MXU matmuls, f32 acc).
    """
    tm = ctx_ref.shape[1]
    d_model = o_ref.shape[1]
    acc = jnp.zeros((tm, d_model), jnp.float32)
    for h in range(n_heads):
        acc = acc + jnp.dot(ctx_ref[h], wo_ref[h],
                            preferred_element_type=jnp.float32)
    o_ref[...] = (acc + bo_ref[...]).astype(o_ref.dtype)


# --------------------------------------------------------------------------- #
# Wrapper                                                                       #
# --------------------------------------------------------------------------- #
def prepare_params(params, *, n_heads, d_k, d_v, d_model):
    """Fuse per-head weights into kernel layouts ONCE (outside the per-call
    path); fold 1/sqrt(d_k) into Wq / bq; cast MXU operands to bf16."""
    wq, wk, wv, wo, bq, bk, bv, bo = params
    scale = 1.0 / math.sqrt(d_k)
    # Head-major columns: (d_model, H*d_k) / (d_model, H*d_v)
    wq_f = jnp.transpose(wq, (1, 0, 2)).reshape(d_model, n_heads * d_k) * scale
    wk_f = jnp.transpose(wk, (1, 0, 2)).reshape(d_model, n_heads * d_k)
    wv_f = jnp.transpose(wv, (1, 0, 2)).reshape(d_model, n_heads * d_v)
    w_qkv = jnp.concatenate([wq_f, wk_f, wv_f], axis=1).astype(jnp.bfloat16)
    b_qkv = jnp.concatenate(
        [bq.reshape(-1) * scale, bk.reshape(-1), bv.reshape(-1)]
    ).reshape(1, -1).astype(jnp.float32)
    w_o = wo.astype(jnp.bfloat16)                        # (H, d_v, d_model)
    b_o = bo.reshape(1, d_model).astype(jnp.float32)
    return w_qkv, b_qkv, w_o, b_o


def multi_head_attention(x, fused_params, *, n_heads, d_k, d_v):
    """x: (B, n, d_model) f32 -> (B, n, d_model) f32."""
    B, n, d_model = x.shape
    w_qkv, b_qkv, w_o, b_o = fused_params
    qkv_width = n_heads * (2 * d_k + d_v)
    M = B * n

    # ------------------ Stage 1: fused QKV projection over all B*n rows -----
    tm = _pick_tile(M, (512, 256, 128))
    x_flat = x.reshape(M, d_model)
    qkv_kernel = functools.partial(_qkv_proj_kernel,
                                   n_heads=n_heads, d_k=d_k, d_v=d_v)
    q, k, v = pl.pallas_call(
        qkv_kernel,
        out_shape=(
            jax.ShapeDtypeStruct((n_heads, M, d_k), jnp.bfloat16),
            jax.ShapeDtypeStruct((n_heads, M, d_k), jnp.bfloat16),
            jax.ShapeDtypeStruct((n_heads, M, d_v), jnp.bfloat16),
        ),
        grid_spec=pltpu.PrefetchScalarGridSpec(
            num_scalar_prefetch=0,
            grid=(M // tm,),
            in_specs=[
                pl.BlockSpec((tm, d_model), lambda i: (i, 0)),           # x rows
                pl.BlockSpec((d_model, qkv_width), lambda i: (0, 0)),    # W_qkv
                pl.BlockSpec((1, qkv_width), lambda i: (0, 0)),          # b_qkv
            ],
            out_specs=(
                pl.BlockSpec((n_heads, tm, d_k), lambda i: (0, i, 0)),   # Q
                pl.BlockSpec((n_heads, tm, d_k), lambda i: (0, i, 0)),   # K
                pl.BlockSpec((n_heads, tm, d_v), lambda i: (0, i, 0)),   # V
            ),
        ),
        compiler_params=pltpu.CompilerParams(
            dimension_semantics=("parallel",),
            vmem_limit_bytes=_VMEM_LIMIT),
    )(x_flat, w_qkv, b_qkv)

    # ------------------ Stage 2: flash attention core ------------------------
    tq = _pick_tile(n, (256, 128))
    tkv = _pick_tile(n, (512, 256, 128))
    nq = n // tq
    nkv = n // tkv
    ctx = pl.pallas_call(
        _flash_attn_kernel,
        out_shape=jax.ShapeDtypeStruct((n_heads, M, d_v), jnp.bfloat16),
        grid_spec=pltpu.PrefetchScalarGridSpec(
            num_scalar_prefetch=0,
            grid=(B, n_heads, nq, nkv),
            in_specs=[
                pl.BlockSpec((1, tq, d_k),
                             lambda b, h, qi, ki: (h, b * nq + qi, 0)),   # Q tile
                pl.BlockSpec((1, tkv, d_k),
                             lambda b, h, qi, ki: (h, b * nkv + ki, 0)),  # K tile
                pl.BlockSpec((1, tkv, d_v),
                             lambda b, h, qi, ki: (h, b * nkv + ki, 0)),  # V tile
            ],
            out_specs=pl.BlockSpec(
                (1, tq, d_v), lambda b, h, qi, ki: (h, b * nq + qi, 0)),
            scratch_shapes=[
                pltpu.VMEM((tq, 1), jnp.float32),      # running max m
                pltpu.VMEM((tq, 1), jnp.float32),      # running denom l
                pltpu.VMEM((tq, d_v), jnp.float32),    # running PV accumulator
            ],
        ),
        compiler_params=pltpu.CompilerParams(
            dimension_semantics=("parallel", "parallel", "parallel", "arbitrary"),
            vmem_limit_bytes=_VMEM_LIMIT),
    )(q, k, v)

    # ------------------ Stage 3: fused output projection over all B*n rows ---
    out_kernel = functools.partial(_out_proj_kernel, n_heads=n_heads)
    out_flat = pl.pallas_call(
        out_kernel,
        out_shape=jax.ShapeDtypeStruct((M, d_model), jnp.float32),
        grid_spec=pltpu.PrefetchScalarGridSpec(
            num_scalar_prefetch=0,
            grid=(M // tm,),
            in_specs=[
                pl.BlockSpec((n_heads, tm, d_v), lambda i: (0, i, 0)),       # ctx
                pl.BlockSpec((n_heads, d_v, d_model), lambda i: (0, 0, 0)),  # W_o
                pl.BlockSpec((1, d_model), lambda i: (0, 0)),                # b_o
            ],
            out_specs=pl.BlockSpec((tm, d_model), lambda i: (i, 0)),
        ),
        compiler_params=pltpu.CompilerParams(
            dimension_semantics=("parallel",),
            vmem_limit_bytes=_VMEM_LIMIT),
    )(ctx, w_o, b_o)

    return out_flat.reshape(B, n, d_model)


# --------------------------------------------------------------------------- #
# Parameter init & plain-JAX reference                                          #
# --------------------------------------------------------------------------- #
def init_params(key, d_model, d_k, d_v, n_heads):
    ks = jax.random.split(key, 8)
    scale_in = 1.0 / math.sqrt(d_model)
    scale_o = 1.0 / math.sqrt(d_v)
    wq = jax.random.normal(ks[0], (n_heads, d_model, d_k), jnp.float32) * scale_in
    wk = jax.random.normal(ks[1], (n_heads, d_model, d_k), jnp.float32) * scale_in
    wv = jax.random.normal(ks[2], (n_heads, d_model, d_v), jnp.float32) * scale_in
    wo = jax.random.normal(ks[3], (n_heads, d_v, d_model), jnp.float32) * scale_o
    bq = jax.random.normal(ks[4], (n_heads, 1, d_k), jnp.float32) * 0.1
    bk = jax.random.normal(ks[5], (n_heads, 1, d_k), jnp.float32) * 0.1
    bv = jax.random.normal(ks[6], (n_heads, 1, d_v), jnp.float32) * 0.1
    bo = jax.random.normal(ks[7], (1, d_model), jnp.float32) * 0.1
    return (wq, wk, wv, wo, bq, bk, bv, bo)


def reference_mha(x, params, *, d_k):
    """Plain-JAX float32 reference for correctness checking."""
    wq, wk, wv, wo, bq, bk, bv, bo = params
    q = jnp.einsum("bnd,hdk->bhnk", x, wq) + bq[None]   # (B,H,n,d_k)
    k = jnp.einsum("bnd,hdk->bhnk", x, wk) + bk[None]
    v = jnp.einsum("bnd,hdk->bhnk", x, wv) + bv[None]
    s = jnp.einsum("bhqk,bhmk->bhqm", q, k) / math.sqrt(d_k)
    p = jax.nn.softmax(s, axis=-1)
    ctx = jnp.einsum("bhqm,bhmv->bhqv", p, v)
    out = jnp.einsum("bhqv,hvd->bqd", ctx, wo) + bo[0]
    return out


if __name__ == "__main__":
    # Small shapes consistent with the module signature:
    # d_model=32, n(seq)=8, d_k=8, d_v=8, n_heads=4, batch=2
    B, n, d_model, d_k, d_v, n_heads = 2, 8, 32, 8, 8, 4

    key = jax.random.PRNGKey(0)
    kx, kp = jax.random.split(key)
    x = jax.random.normal(kx, (B, n, d_model), jnp.float32)
    params = init_params(kp, d_model, d_k, d_v, n_heads)
    fused = prepare_params(params, n_heads=n_heads, d_k=d_k, d_v=d_v,
                           d_model=d_model)

    out = multi_head_attention(x, fused, n_heads=n_heads, d_k=d_k, d_v=d_v)
    out = jax.block_until_ready(out)

    ref = reference_mha(x, params, d_k=d_k)
    assert out.shape == (B, n, d_model)
    # Tolerance reflects bf16 MXU operands / bf16 intermediates
    # (f32 accumulation, f32 softmax).
    assert jnp.allclose(out, ref, atol=1e-1, rtol=1e-1)

    print("KERNEL_OK")
</pallas_src>

<mosaic_0001>
module attributes {stable_mosaic.version = 11 : i64} {
  func.func @_qkv_proj_kernel(%arg0: i32, %arg1: memref<16x32xf32, #tpu.memory_space<vmem>>, %arg2: memref<32x96xbf16, #tpu.memory_space<vmem>>, %arg3: memref<1x96xf32, #tpu.memory_space<vmem>>, %arg4: memref<4x16x8xbf16, #tpu.memory_space<vmem>>, %arg5: memref<4x16x8xbf16, #tpu.memory_space<vmem>>, %arg6: memref<4x16x8xbf16, #tpu.memory_space<vmem>>) attributes {dimension_semantics = [#tpu.dimension_semantics<parallel>], iteration_bounds = array<i64: 1>, scalar_prefetch = 0 : i64, scratch_operands = 0 : i64, tpu.core_type = #tpu.core_type<tc>, window_params = [{transform_indices = @transform_0, window_bounds = array<i64: 16, 32>}, {pipeline_mode = #tpu.pipeline_mode<synchronous>, transform_indices = @transform_1, window_bounds = array<i64: 32, 96>}, {pipeline_mode = #tpu.pipeline_mode<synchronous>, transform_indices = @transform_2, window_bounds = array<i64: 1, 96>}, {transform_indices = @transform_3, window_bounds = array<i64: 4, 16, 8>}, {transform_indices = @transform_4, window_bounds = array<i64: 4, 16, 8>}, {transform_indices = @transform_5, window_bounds = array<i64: 4, 16, 8>}]} {
    %c0 = arith.constant 0 : index
    %c0_0 = arith.constant 0 : index
    %0 = vector.load %arg1[%c0, %c0_0] : memref<16x32xf32, #tpu.memory_space<vmem>>, vector<16x32xf32>
    %1 = arith.truncf %0 : vector<16x32xf32> to vector<16x32xbf16>
    %c0_1 = arith.constant 0 : index
    %c0_2 = arith.constant 0 : index
    %2 = vector.load %arg2[%c0_1, %c0_2] : memref<32x96xbf16, #tpu.memory_space<vmem>>, vector<32x96xbf16>
    %cst = arith.constant dense<0.000000e+00> : vector<16x96xf32>
    %3 = tpu.matmul %1, %2, %cst {dimension_numbers = #tpu.dot_dimension_numbers<[1], [0], [0], [1], [0, 0, 1, 1], [], []>} : vector<16x32xbf16>, vector<32x96xbf16>, vector<16x96xf32> -> vector<16x96xf32>
    %c0_3 = arith.constant 0 : index
    %c0_4 = arith.constant 0 : index
    %4 = vector.load %arg3[%c0_3, %c0_4] : memref<1x96xf32, #tpu.memory_space<vmem>>, vector<1x96xf32>
    %5 = vector.broadcast %4 : vector<1x96xf32> to vector<16x96xf32>
    %6 = arith.addf %3, %5 : vector<16x96xf32>
    %7 = vector.extract_strided_slice %6 {offsets = [0, 0], sizes = [16, 8], strides = [1, 1]} : vector<16x96xf32> to vector<16x8xf32>
    %8 = arith.truncf %7 : vector<16x8xf32> to vector<16x8xbf16>
    %c0_5 = arith.constant 0 : index
    %c0_6 = arith.constant 0 : index
    %c0_7 = arith.constant 0 : index
    %9 = vector.load %arg4[%c0_5, %c0_6, %c0_7] : memref<4x16x8xbf16, #tpu.memory_space<vmem>>, vector<1x16x8xbf16>
    %10 = vector.shape_cast %9 : vector<1x16x8xbf16> to vector<16x8xbf16>
    %11 = vector.shape_cast %8 : vector<16x8xbf16> to vector<1x16x8xbf16>
    tpu.vector_store %arg4[%c0_5, %c0_6, %c0_7], %11 {strides = array<i32>} : memref<4x16x8xbf16, #tpu.memory_space<vmem>>, vector<1x16x8xbf16>,
    %12 = vector.extract_strided_slice %6 {offsets = [0, 32], sizes = [16, 8], strides = [1, 1]} : vector<16x96xf32> to vector<16x8xf32>
    %13 = arith.truncf %12 : vector<16x8xf32> to vector<16x8xbf16>
    %c0_8 = arith.constant 0 : index
    %c0_9 = arith.constant 0 : index
    %c0_10 = arith.constant 0 : index
    %14 = vector.load %arg5[%c0_8, %c0_9, %c0_10] : memref<4x16x8xbf16, #tpu.memory_space<vmem>>, vector<1x16x8xbf16>
    %15 = vector.shape_cast %14 : vector<1x16x8xbf16> to vector<16x8xbf16>
    %16 = vector.shape_cast %13 : vector<16x8xbf16> to vector<1x16x8xbf16>
    tpu.vector_store %arg5[%c0_8, %c0_9, %c0_10], %16 {strides = array<i32>} : memref<4x16x8xbf16, #tpu.memory_space<vmem>>, vector<1x16x8xbf16>,
    %17 = vector.extract_strided_slice %6 {offsets = [0, 64], sizes = [16, 8], strides = [1, 1]} : vector<16x96xf32> to vector<16x8xf32>
    %18 = arith.truncf %17 : vector<16x8xf32> to vector<16x8xbf16>
    %c0_11 = arith.constant 0 : index
    %c0_12 = arith.constant 0 : index
    %c0_13 = arith.constant 0 : index
    %19 = vector.load %arg6[%c0_11, %c0_12, %c0_13] : memref<4x16x8xbf16, #tpu.memory_space<vmem>>, vector<1x16x8xbf16>
    %20 = vector.shape_cast %19 : vector<1x16x8xbf16> to vector<16x8xbf16>
    %21 = vector.shape_cast %18 : vector<16x8xbf16> to vector<1x16x8xbf16>
    tpu.vector_store %arg6[%c0_11, %c0_12, %c0_13], %21 {strides = array<i32>} : memref<4x16x8xbf16, #tpu.memory_space<vmem>>, vector<1x16x8xbf16>,
    %22 = vector.extract_strided_slice %6 {offsets = [0, 8], sizes = [16, 8], strides = [1, 1]} : vector<16x96xf32> to vector<16x8xf32>
    %23 = arith.truncf %22 : vector<16x8xf32> to vector<16x8xbf16>
    %c1 = arith.constant 1 : index
    %c0_14 = arith.constant 0 : index
    %c0_15 = arith.constant 0 : index
    %24 = vector.load %arg4[%c1, %c0_14, %c0_15] : memref<4x16x8xbf16, #tpu.memory_space<vmem>>, vector<1x16x8xbf16>
    %25 = vector.shape_cast %24 : vector<1x16x8xbf16> to vector<16x8xbf16>
    %26 = vector.shape_cast %23 : vector<16x8xbf16> to vector<1x16x8xbf16>
    tpu.vector_store %arg4[%c1, %c0_14, %c0_15], %26 {strides = array<i32>} : memref<4x16x8xbf16, #tpu.memory_space<vmem>>, vector<1x16x8xbf16>,
    %27 = vector.extract_strided_slice %6 {offsets = [0, 40], sizes = [16, 8], strides = [1, 1]} : vector<16x96xf32> to vector<16x8xf32>
    %28 = arith.truncf %27 : vector<16x8xf32> to vector<16x8xbf16>
    %c1_16 = arith.constant 1 : index
    %c0_17 = arith.constant 0 : index
    %c0_18 = arith.constant 0 : index
    %29 = vector.load %arg5[%c1_16, %c0_17, %c0_18] : memref<4x16x8xbf16, #tpu.memory_space<vmem>>, vector<1x16x8xbf16>
    %30 = vector.shape_cast %29 : vector<1x16x8xbf16> to vector<16x8xbf16>
    %31 = vector.shape_cast %28 : vector<16x8xbf16> to vector<1x16x8xbf16>
    tpu.vector_store %arg5[%c1_16, %c0_17, %c0_18], %31 {strides = array<i32>} : memref<4x16x8xbf16, #tpu.memory_space<vmem>>, vector<1x16x8xbf16>,
    %32 = vector.extract_strided_slice %6 {offsets = [0, 72], sizes = [16, 8], strides = [1, 1]} : vector<16x96xf32> to vector<16x8xf32>
    %33 = arith.truncf %32 : vector<16x8xf32> to vector<16x8xbf16>
    %c1_19 = arith.constant 1 : index
    %c0_20 = arith.constant 0 : index
    %c0_21 = arith.constant 0 : index
    %34 = vector.load %arg6[%c1_19, %c0_20, %c0_21] : memref<4x16x8xbf16, #tpu.memory_space<vmem>>, vector<1x16x8xbf16>
    %35 = vector.shape_cast %34 : vector<1x16x8xbf16> to vector<16x8xbf16>
    %36 = vector.shape_cast %33 : vector<16x8xbf16> to vector<1x16x8xbf16>
    tpu.vector_store %arg6[%c1_19, %c0_20, %c0_21], %36 {strides = array<i32>} : memref<4x16x8xbf16, #tpu.memory_space<vmem>>, vector<1x16x8xbf16>,
    %37 = vector.extract_strided_slice %6 {offsets = [0, 16], sizes = [16, 8], strides = [1, 1]} : vector<16x96xf32> to vector<16x8xf32>
    %38 = arith.truncf %37 : vector<16x8xf32> to vector<16x8xbf16>
    %c2 = arith.constant 2 : index
    %c0_22 = arith.constant 0 : index
    %c0_23 = arith.constant 0 : index
    %39 = vector.load %arg4[%c2, %c0_22, %c0_23] : memref<4x16x8xbf16, #tpu.memory_space<vmem>>, vector<1x16x8xbf16>
    %40 = vector.shape_cast %39 : vector<1x16x8xbf16> to vector<16x8xbf16>
    %41 = vector.shape_cast %38 : vector<16x8xbf16> to vector<1x16x8xbf16>
    tpu.vector_store %arg4[%c2, %c0_22, %c0_23], %41 {strides = array<i32>} : memref<4x16x8xbf16, #tpu.memory_space<vmem>>, vector<1x16x8xbf16>,
    %42 = vector.extract_strided_slice %6 {offsets = [0, 48], sizes = [16, 8], strides = [1, 1]} : vector<16x96xf32> to vector<16x8xf32>
    %43 = arith.truncf %42 : vector<16x8xf32> to vector<16x8xbf16>
    %c2_24 = arith.constant 2 : index
    %c0_25 = arith.constant 0 : index
    %c0_26 = arith.constant 0 : index
    %44 = vector.load %arg5[%c2_24, %c0_25, %c0_26] : memref<4x16x8xbf16, #tpu.memory_space<vmem>>, vector<1x16x8xbf16>
    %45 = vector.shape_cast %44 : vector<1x16x8xbf16> to vector<16x8xbf16>
    %46 = vector.shape_cast %43 : vector<16x8xbf16> to vector<1x16x8xbf16>
    tpu.vector_store %arg5[%c2_24, %c0_25, %c0_26], %46 {strides = array<i32>} : memref<4x16x8xbf16, #tpu.memory_space<vmem>>, vector<1x16x8xbf16>,
    %47 = vector.extract_strided_slice %6 {offsets = [0, 80], sizes = [16, 8], strides = [1, 1]} : vector<16x96xf32> to vector<16x8xf32>
    %48 = arith.truncf %47 : vector<16x8xf32> to vector<16x8xbf16>
    %c2_27 = arith.constant 2 : index
    %c0_28 = arith.constant 0 : index
    %c0_29 = arith.constant 0 : index
    %49 = vector.load %arg6[%c2_27, %c0_28, %c0_29] : memref<4x16x8xbf16, #tpu.memory_space<vmem>>, vector<1x16x8xbf16>
    %50 = vector.shape_cast %49 : vector<1x16x8xbf16> to vector<16x8xbf16>
    %51 = vector.shape_cast %48 : vector<16x8xbf16> to vector<1x16x8xbf16>
    tpu.vector_store %arg6[%c2_27, %c0_28, %c0_29], %51 {strides = array<i32>} : memref<4x16x8xbf16, #tpu.memory_space<vmem>>, vector<1x16x8xbf16>,
    %52 = vector.extract_strided_slice %6 {offsets = [0, 24], sizes = [16, 8], strides = [1, 1]} : vector<16x96xf32> to vector<16x8xf32>
    %53 = arith.truncf %52 : vector<16x8xf32> to vector<16x8xbf16>
    %c3 = arith.constant 3 : index
    %c0_30 = arith.constant 0 : index
    %c0_31 = arith.constant 0 : index
    %54 = vector.load %arg4[%c3, %c0_30, %c0_31] : memref<4x16x8xbf16, #tpu.memory_space<vmem>>, vector<1x16x8xbf16>
    %55 = vector.shape_cast %54 : vector<1x16x8xbf16> to vector<16x8xbf16>
    %56 = vector.shape_cast %53 : vector<16x8xbf16> to vector<1x16x8xbf16>
    tpu.vector_store %arg4[%c3, %c0_30, %c0_31], %56 {strides = array<i32>} : memref<4x16x8xbf16, #tpu.memory_space<vmem>>, vector<1x16x8xbf16>,
    %57 = vector.extract_strided_slice %6 {offsets = [0, 56], sizes = [16, 8], strides = [1, 1]} : vector<16x96xf32> to vector<16x8xf32>
    %58 = arith.truncf %57 : vector<16x8xf32> to vector<16x8xbf16>
    %c3_32 = arith.constant 3 : index
    %c0_33 = arith.constant 0 : index
    %c0_34 = arith.constant 0 : index
    %59 = vector.load %arg5[%c3_32, %c0_33, %c0_34] : memref<4x16x8xbf16, #tpu.memory_space<vmem>>, vector<1x16x8xbf16>
    %60 = vector.shape_cast %59 : vector<1x16x8xbf16> to vector<16x8xbf16>
    %61 = vector.shape_cast %58 : vector<16x8xbf16> to vector<1x16x8xbf16>
    tpu.vector_store %arg5[%c3_32, %c0_33, %c0_34], %61 {strides = array<i32>} : memref<4x16x8xbf16, #tpu.memory_space<vmem>>, vector<1x16x8xbf16>,
    %62 = vector.extract_strided_slice %6 {offsets = [0, 88], sizes = [16, 8], strides = [1, 1]} : vector<16x96xf32> to vector<16x8xf32>
    %63 = arith.truncf %62 : vector<16x8xf32> to vector<16x8xbf16>
    %c3_35 = arith.constant 3 : index
    %c0_36 = arith.constant 0 : index
    %c0_37 = arith.constant 0 : index
    %64 = vector.load %arg6[%c3_35, %c0_36, %c0_37] : memref<4x16x8xbf16, #tpu.memory_space<vmem>>, vector<1x16x8xbf16>
    %65 = vector.shape_cast %64 : vector<1x16x8xbf16> to vector<16x8xbf16>
    %66 = vector.shape_cast %63 : vector<16x8xbf16> to vector<1x16x8xbf16>
    tpu.vector_store %arg6[%c3_35, %c0_36, %c0_37], %66 {strides = array<i32>} : memref<4x16x8xbf16, #tpu.memory_space<vmem>>, vector<1x16x8xbf16>,
    return
  }
  func.func @transform_0(%arg0: i32) -> (i32, i32) {
    %c0_i32 = arith.constant 0 : i32
    %c0_i32_0 = arith.constant 0 : i32
    return %arg0, %c0_i32 : i32, i32
  }
  func.func @transform_1(%arg0: i32) -> (i32, i32) {
    %c0_i32 = arith.constant 0 : i32
    %c0_i32_0 = arith.constant 0 : i32
    %c0_i32_1 = arith.constant 0 : i32
    return %c0_i32, %c0_i32_0 : i32, i32
  }
  func.func @transform_2(%arg0: i32) -> (i32, i32) {
    %c0_i32 = arith.constant 0 : i32
    %c0_i32_0 = arith.constant 0 : i32
    %c0_i32_1 = arith.constant 0 : i32
    return %c0_i32, %c0_i32_0 : i32, i32
  }
  func.func @transform_3(%arg0: i32) -> (i32, i32, i32) {
    %c0_i32 = arith.constant 0 : i32
    %c0_i32_0 = arith.constant 0 : i32
    %c0_i32_1 = arith.constant 0 : i32
    return %c0_i32, %arg0, %c0_i32_0 : i32, i32, i32
  }
  func.func @transform_4(%arg0: i32) -> (i32, i32, i32) {
    %c0_i32 = arith.constant 0 : i32
    %c0_i32_0 = arith.constant 0 : i32
    %c0_i32_1 = arith.constant 0 : i32
    return %c0_i32, %arg0, %c0_i32_0 : i32, i32, i32
  }
  func.func @transform_5(%arg0: i32) -> (i32, i32, i32) {
    %c0_i32 = arith.constant 0 : i32
    %c0_i32_0 = arith.constant 0 : i32
    %c0_i32_1 = arith.constant 0 : i32
    return %c0_i32, %arg0, %c0_i32_0 : i32, i32, i32
  }
}

</mosaic_0001>

<llo_original>
// kernel: tpu_custom_call.1
$region0: #{tpu_custom_call.1}
  #allocation0 [shape = 'u32[]', space=smem, size = 0x4, offset = 0x4, fixed_abs, tag = 'smem constant byte address 0x4 - core index']
  #allocation1 [shape = 'u32[144,128]{1,0:T(1,128)}', space=vmem, size = 0x12000, scoped, tag = 'internal scratch']
  %s0 = inlined_call_operand.hbm [shape: f32[16,32], index: 0, kind: input, shape index: {}]
  %s1 = inlined_call_operand.hbm [shape: bf16[32,96], index: 1, kind: input, shape index: {}]
  %s2 = inlined_call_operand.vmem [shape: f32[1,96], index: 2, kind: input, shape index: {}]
  %s3 = inlined_call_operand.vmem [shape: bf16[4,16,8], index: 3, kind: output, shape index: {0}]
  %s4 = inlined_call_operand.vmem [shape: bf16[4,16,8], index: 4, kind: output, shape index: {1}]
  %s5 = inlined_call_operand.vmem [shape: bf16[4,16,8], index: 5, kind: output, shape index: {2}]
  %6 = xla_tuple %s3, %s4, %s5
  %s7 = sld [smem:[#allocation0]]
  $region46: #{tpu_custom_call.1} parent=0
    _
  %s9 = ssub.s32 1, %s7
  %s10 = scalar_select 0, %s9, %s7
  $region1: #{tpu_custom_call.1} parent=0
    #allocation2 [shape = 'u8[8192]{0}', space=vmem, size = 0x2000, scoped, tag = 'input window, operand 0, single buffered']
    #allocation3 [shape = 's32[1]{0}', space=sflag, size = 0x4, scoped, tag = 'scoped memory for tpu_custom_call.1']
    #allocation4 [shape = 'u8[8192]{0}', space=vmem, size = 0x2000, scoped, tag = 'input window, operand 1, single buffered']
    #allocation5 [shape = 's32[1]{0}', space=sflag, size = 0x4, scoped, tag = 'scoped memory for tpu_custom_call.1']
    %11 = vsyncpa [#allocation3], 0
    %12 = vsyncpa [#allocation5], 0
    // Predicated region
    $region2: #{tpu_custom_call.1} parent=1 // pred_check
      _
    $region3: #{tpu_custom_call.1} parent=1 // pred_check_branch
      %14 = sbr.rel (0) target = $region5
    $region4: #{tpu_custom_call.1} parent=1 // pred_region
      %s16 = ssub.s32 256, 256
      %17 = vsyncadd [#allocation3], %s16
      %s18 = sshll.u32 [#allocation2], 4
      %s19 = int_to_ptr.vmem [resolvable:$true] %s18
      %24 = dma.hbm_to_vmem [thread:$0]  %s0, 256, %s19, [#allocation3], 128, 128, 8
    $region5: #{tpu_custom_call.1} parent=1 // pred_fallthru
      _
    // Predicated region
    $region6: #{tpu_custom_call.1} parent=1 // pred_check
      _
    $region7: #{tpu_custom_call.1} parent=1 // pred_check_branch
      %26 = sbr.rel (0) target = $region9
    $region8: #{tpu_custom_call.1} parent=1 // pred_region
      %s28 = ssub.s32 256, 256
      %29 = vsyncadd [#allocation5], %s28
      %s30 = sshll.u32 [#allocation4], 4
      %s31 = int_to_ptr.vmem [resolvable:$true] %s30
      %36 = dma.hbm_to_vmem [thread:$0]  %s1, 256, %s31, [#allocation5], 64, 64, 4
    $region9: #{tpu_custom_call.1} parent=1 // pred_fallthru
      _
    // Predicated region
    $region10: #{tpu_custom_call.1} parent=1 // pred_check
      _
    $region11: #{tpu_custom_call.1} parent=1 // pred_check_branch
      %38 = sbr.rel (0) target = $region13
    $region12: #{tpu_custom_call.1} parent=1 // pred_region
      _
    $region13: #{tpu_custom_call.1} parent=1 // pred_fallthru
      _
    // Predicated region
    $region14: #{tpu_custom_call.1} parent=1 // pred_check
      _
    $region15: #{tpu_custom_call.1} parent=1 // pred_check_branch
      %40 = sbr.rel (0) target = $region17
    $region16: #{tpu_custom_call.1} parent=1 // pred_region
      %41 = dma.done [#allocation3], 256
    $region17: #{tpu_custom_call.1} parent=1 // pred_fallthru
      _
    // Predicated region
    $region18: #{tpu_custom_call.1} parent=1 // pred_check
      _
    $region19: #{tpu_custom_call.1} parent=1 // pred_check_branch
      %43 = sbr.rel (0) target = $region21
    $region20: #{tpu_custom_call.1} parent=1 // pred_region
      %44 = dma.done [#allocation5], 256
    $region21: #{tpu_custom_call.1} parent=1 // pred_fallthru
      _
    %v46 = vld [vmem:[#allocation2] sm:$0xff]
    %v47 = vld [vmem:[#allocation2 + $0x8] sm:$0xff]
    %v48 = vpack.c.bf16 %v47, %v46
    %v49 = vld [vmem:[#allocation4] sm:$0xf]
    %v50 = vld [vmem:[#allocation4 + $0x4] sm:$0xf]
    %v51 = vld [vmem:[#allocation4 + $0x8] sm:$0xf]
    %v52 = vld [vmem:[#allocation4 + $0xc] sm:$0xf]
    %v53 = vld [vmem:[%s2] sm:$0x1]
    %v55 = vlaneseq
    %v56 = vshrl.u32 %v55, 7
    %v57 = vsub.s32 0, %v56
    %v58 = vrot.slane %v53, %v57
    %v64 = vunpack.c.l.b16 %v49
    %v65 = vunpack.c.l.b16 %v50
    %v66 = vunpack.c.l.b16 %v51
    %v67 = vunpack.c.l.b16 %v52
    %v68 = vpack.c.b16 %v65, %v64
    %v69 = vpack.c.b16 %v67, %v66
    %vm72 = vcmask 261120
    %v74 = vsel %vm72, %v48, 0
    %76 = vmatprep.subr.bf16.mxu0 0
    %77 = vmatpush1.bf16.msra.mxu0 0
    %78 = vmatprep.subr.bf16.mxu0 0
    %79 = vmatpush1.bf16.msra.mxu0 0
    %80 = vmatprep.subr.bf16.mxu0 0
    %81 = vmatpush1.bf16.msra.mxu0 0
    %82 = vmatprep.subr.bf16.mxu0 0
    %83 = vmatpush1.bf16.msra.mxu0 0
    %84 = vmatprep.subr.bf16.mxu0 0
    %85 = vmatpush1.bf16.msra.mxu0 0
    %86 = vmatprep.subr.bf16.mxu0 0
    %87 = vmatpush1.bf16.msra.mxu0 0
    %88 = vmatprep.subr.bf16.mxu0 0
    %89 = vmatpush1.bf16.msra.mxu0 %v69
    %90 = vmatprep.subr.bf16.mxu0 0
    %91 = vmatpush1.bf16.msra.mxu0 %v68
    %92 = vmatprep.subr.bf16.mxu0 0
    %93 = vmatpush2.bf16.msra.mxu0 0
    %94 = vmatprep.subr.bf16.mxu0 0
    %95 = vmatpush2.bf16.msra.mxu0 0
    %96 = vmatprep.subr.bf16.mxu0 0
    %97 = vmatpush2.bf16.msra.mxu0 0
    %98 = vmatprep.subr.bf16.mxu0 0
    %99 = vmatpush2.bf16.msra.mxu0 0
    %100 = vmatprep.subr.bf16.mxu0 0
    %101 = vmatpush2.bf16.msra.mxu0 0
    %102 = vmatprep.subr.bf16.mxu0 0
    %103 = vmatpush2.bf16.msra.mxu0 0
    %104 = vmatprep.subr.bf16.mxu0 0
    %105 = vmatpush2.bf16.msra.mxu0 0
    %106 = vmatprep.subr.bf16.mxu0 0
    %107 = vmatpush2.bf16.msra.mxu0 0
    %108 = vmatprep.mubr.bf16.mxu0 0
    %109 = vmatmul.mubr.bf16.gmra.mxu0 %v74
    %v110 = vpop.f32.mrf.mxu0
    %v111 = vadd.f32 %v58, %v110
    %v112 = vpop.f32.mrf.mxu0
    %v113 = vpop.f32.mrf.mxu0
    %v114 = vadd.f32 %v58, %v113
    %v115 = vpop.f32.mrf.mxu0
    %116 = vdwg.mxu0
    %v117 = vpack.c.bf16 %v114, %v111
    %v119 = vunpack.c.l.b16 %v117
    %v120 = vunpack.c.h.b16 %v117
    %v121 = vpack.c.b16 %v119, %v119
    %v122 = vpack.c.b16 %v120, %v120
    %vm125 = vcmask 60416
    %126 = vst.msk [vmem:[%s3] sm:$0xf] %vm125, %v121
    %127 = vst.msk [vmem:[%s3 + $0x4] sm:$0xf] %vm125, %v122
    %128 = vrot.lane.b32.xlu0 %v121, 96
    %v129 = vpop.permute.xlu0 %128
    %130 = vrot.lane.b32.xlu0 %v122, 96
    %v131 = vpop.permute.xlu0 %130
    %134 = vst.msk [vmem:[%s4] sm:$0xf] %vm125, %v129
    %135 = vst.msk [vmem:[%s4 + $0x4] sm:$0xf] %vm125, %v131
    %136 = vrot.lane.b32.xlu0 %v121, 64
    %v137 = vpop.permute.xlu0 %136
    %138 = vrot.lane.b32.xlu0 %v122, 64
    %v139 = vpop.permute.xlu0 %138
    %142 = vst.msk [vmem:[%s5] sm:$0xf] %vm125, %v137
    %143 = vst.msk [vmem:[%s5 + $0x4] sm:$0xf] %vm125, %v139
    %144 = vrot.lane.b32.xlu0 %v121, 120
    %v145 = vpop.permute.xlu0 %144
    %146 = vrot.lane.b32.xlu0 %v122, 120
    %v147 = vpop.permute.xlu0 %146
    %s150 = scalar_lea.vmem %s3, 8
    %151 = vst.msk [vmem:[%s150] sm:$0xf] %vm125, %v145
    %152 = vst.msk [vmem:[%s150 + $0x4] sm:$0xf] %vm125, %v147
    %153 = vrot.lane.b32.xlu0 %v121, 88
    %v154 = vpop.permute.xlu0 %153
    %155 = vrot.lane.b32.xlu0 %v122, 88
    %v156 = vpop.permute.xlu0 %155
    %s159 = scalar_lea.vmem %s4, 8
    %160 = vst.msk [vmem:[%s159] sm:$0xf] %vm125, %v154
    %161 = vst.msk [vmem:[%s159 + $0x4] sm:$0xf] %vm125, %v156
    %162 = vrot.lane.b32.xlu0 %v121, 56
    %v163 = vpop.permute.xlu0 %162
    %164 = vrot.lane.b32.xlu0 %v122, 56
    %v165 = vpop.permute.xlu0 %164
    %s168 = scalar_lea.vmem %s5, 8
    %169 = vst.msk [vmem:[%s168] sm:$0xf] %vm125, %v163
    %170 = vst.msk [vmem:[%s168 + $0x4] sm:$0xf] %vm125, %v165
    %171 = vrot.lane.b32.xlu0 %v121, 112
    %v172 = vpop.permute.xlu0 %171
    %173 = vrot.lane.b32.xlu0 %v122, 112
    %v174 = vpop.permute.xlu0 %173
    %s177 = scalar_lea.vmem %s3, 16
    %178 = vst.msk [vmem:[%s177] sm:$0xf] %vm125, %v172
    %179 = vst.msk [vmem:[%s177 + $0x4] sm:$0xf] %vm125, %v174
    %180 = vrot.lane.b32.xlu0 %v121, 80
    %v181 = vpop.permute.xlu0 %180
    %182 = vrot.lane.b32.xlu0 %v122, 80
    %v183 = vpop.permute.xlu0 %182
    %s186 = scalar_lea.vmem %s4, 16
    %187 = vst.msk [vmem:[%s186] sm:$0xf] %vm125, %v181
    %188 = vst.msk [vmem:[%s186 + $0x4] sm:$0xf] %vm125, %v183
    %189 = vrot.lane.b32.xlu0 %v121, 48
    %v190 = vpop.permute.xlu0 %189
    %191 = vrot.lane.b32.xlu0 %v122, 48
    %v192 = vpop.permute.xlu0 %191
    %s195 = scalar_lea.vmem %s5, 16
    %196 = vst.msk [vmem:[%s195] sm:$0xf] %vm125, %v190
    %197 = vst.msk [vmem:[%s195 + $0x4] sm:$0xf] %vm125, %v192
    %198 = vrot.lane.b32.xlu0 %v121, 104
    %v199 = vpop.permute.xlu0 %198
    %200 = vrot.lane.b32.xlu0 %v122, 104
    %v201 = vpop.permute.xlu0 %200
    %s204 = scalar_lea.vmem %s3, 24
    %205 = vst.msk [vmem:[%s204] sm:$0xf] %vm125, %v199
    %206 = vst.msk [vmem:[%s204 + $0x4] sm:$0xf] %vm125, %v201
    %207 = vrot.lane.b32.xlu0 %v121, 72
    %v208 = vpop.permute.xlu0 %207
    %209 = vrot.lane.b32.xlu0 %v122, 72
    %v210 = vpop.permute.xlu0 %209
    %s213 = scalar_lea.vmem %s4, 24
    %214 = vst.msk [vmem:[%s213] sm:$0xf] %vm125, %v208
    %215 = vst.msk [vmem:[%s213 + $0x4] sm:$0xf] %vm125, %v210
    %216 = vrot.lane.b32.xlu0 %v121, 40
    %v217 = vpop.permute.xlu0 %216
    %218 = vrot.lane.b32.xlu0 %v122, 40
    %v219 = vpop.permute.xlu0 %218
    %s222 = scalar_lea.vmem %s5, 24
    %223 = vst.msk [vmem:[%s222] sm:$0xf] %vm125, %v217
    %224 = vst.msk [vmem:[%s222 + $0x4] sm:$0xf] %vm125, %v219
    // Predicated region
    $region22: #{tpu_custom_call.1} parent=1 // pred_check
      _
    $region23: #{tpu_custom_call.1} parent=1 // pred_check_branch
      %226 = sbr.rel (0) target = $region25
    $region24: #{tpu_custom_call.1} parent=1 // pred_region
      _
    $region25: #{tpu_custom_call.1} parent=1 // pred_fallthru
      _
    // Predicated region
    $region26: #{tpu_custom_call.1} parent=1 // pred_check
      _
    $region27: #{tpu_custom_call.1} parent=1 // pred_check_branch
      %228 = sbr.rel (0) target = $region29
    $region28: #{tpu_custom_call.1} parent=1 // pred_region
      _
    $region29: #{tpu_custom_call.1} parent=1 // pred_fallthru
      _
    // Predicated region
    $region30: #{tpu_custom_call.1} parent=1 // pred_check
      _
    $region31: #{tpu_custom_call.1} parent=1 // pred_check_branch
      %230 = sbr.rel (0) target = $region33
    $region32: #{tpu_custom_call.1} parent=1 // pred_region
      _
    $region33: #{tpu_custom_call.1} parent=1 // pred_fallthru
      _
    // Predicated region
    $region34: #{tpu_custom_call.1} parent=1 // pred_check
      _
    $region35: #{tpu_custom_call.1} parent=1 // pred_check_branch
      %232 = sbr.rel (0) target = $region37
    $region36: #{tpu_custom_call.1} parent=1 // pred_region
      _
    $region37: #{tpu_custom_call.1} parent=1 // pred_fallthru
      _
    // Predicated region
    $region38: #{tpu_custom_call.1} parent=1 // pred_check
      _
    $region39: #{tpu_custom_call.1} parent=1 // pred_check_branch
      %234 = sbr.rel (0) target = $region41
    $region40: #{tpu_custom_call.1} parent=1 // pred_region
      _
    $region41: #{tpu_custom_call.1} parent=1 // pred_fallthru
      _
    // Predicated region
    $region42: #{tpu_custom_call.1} parent=1 // pred_check
      _
    $region43: #{tpu_custom_call.1} parent=1 // pred_check_branch
      %236 = sbr.rel (0) target = $region45
    $region44: #{tpu_custom_call.1} parent=1 // pred_region
      _
    $region45: #{tpu_custom_call.1} parent=1 // pred_fallthru
      _
    %237 = vsyncpa [#allocation3], 1
    %238 = vsyncpa [#allocation5], 1

</llo_original>
